<compile_context>
chip_gen: v6e
topology: v6e:2x2x1
jax: 0.10.0
libtpu: 0.0.40
codegen_flags: <defaults>
</compile_context>

<pallas_src>
import jax
import jax.numpy as jnp
from jax import lax
from jax.experimental import pallas as pl
from jax.experimental.pallas import tpu as pltpu

# ----------------------------- architecture ---------------------------------
INPUT_NEURONS_BRANCH = 100     # m : number of sensors
INPUT_NEURONS_TRUNK = 1
HIDDEN = 40
OUTPUT_NEURONS = 40            # p

BRANCH_LAYERS = [INPUT_NEURONS_BRANCH] + [HIDDEN] * 3 + [OUTPUT_NEURONS]
TRUNK_LAYERS = [INPUT_NEURONS_TRUNK] + [HIDDEN] * 3 + [OUTPUT_NEURONS]


# ------------------------------- kernel -------------------------------------
def deeponet_kernel(bx_ref, tx_ref, bw0_ref, bwh_ref, bb_ref, twh_ref,
                    tsmall_ref, out_ref):
    """One batch tile per grid step.  Everything here lives in VMEM.

    bx_ref     : (TB, m)          branch inputs for this batch tile
    tx_ref     : (TB*neval, 1)    trunk inputs (flattened) for this batch tile
    bw0_ref    : (m, p)
    bwh_ref    : (3, p, p)        branch weights, layers 1..3
    bb_ref     : (4, p)           branch biases, layers 0..3
    twh_ref    : (3, p, p)        trunk weights, layers 1..3
    tsmall_ref : (5, p)           row 0: trunk W0 (1->p); rows 1..4: trunk biases
    out_ref    : (TB, neval)
    """
    f32 = jnp.float32

    # ---- branch net: (TB, m) -> (TB, p), ReLU on hidden layers only ----------
    h = jnp.dot(bx_ref[...], bw0_ref[...], preferred_element_type=f32)
    h = jnp.maximum(h + bb_ref[0:1, :], 0.0)
    h = jnp.dot(h, bwh_ref[0], preferred_element_type=f32)
    h = jnp.maximum(h + bb_ref[1:2, :], 0.0)
    h = jnp.dot(h, bwh_ref[1], preferred_element_type=f32)
    h = jnp.maximum(h + bb_ref[2:3, :], 0.0)
    branch_out = jnp.dot(h, bwh_ref[2], preferred_element_type=f32) + bb_ref[3:4, :]

    # ---- trunk net: (TB*neval, 1) -> (TB*neval, p) ----------------------------
    # First layer has in_dim == 1 -> broadcast multiply instead of a degenerate
    # (N,1)@(1,p) matmul.
    t = jnp.maximum(tx_ref[...] * tsmall_ref[0:1, :] + tsmall_ref[1:2, :], 0.0)
    t = jnp.dot(t, twh_ref[0], preferred_element_type=f32)
    t = jnp.maximum(t + tsmall_ref[2:3, :], 0.0)
    t = jnp.dot(t, twh_ref[1], preferred_element_type=f32)
    t = jnp.maximum(t + tsmall_ref[3:4, :], 0.0)
    trunk_out = jnp.dot(t, twh_ref[2], preferred_element_type=f32) + tsmall_ref[4:5, :]

    # ---- einsum('ijk, ilk -> il') with j == 1, without a 3-D reshape ----------
    # out[b, l] = sum_k branch_out[b, k] * trunk_out[b*neval + l, k]
    tb, neval = out_ref.shape
    dn = (((1,), (1,)), ((), ()))          # contract last dims: A @ B^T (MXU-native)
    for b in range(tb):                    # tb is small and static
        t_slice = trunk_out[b * neval:(b + 1) * neval, :]        # (neval, p)
        out_ref[b:b + 1, :] = lax.dot_general(
            branch_out[b:b + 1, :], t_slice, dn,
            preferred_element_type=f32)                          # (1, neval)


# ------------------------------ helpers --------------------------------------
def _batch_tile(bs: int) -> int:
    """Pick a batch tile: the block's leading dim must be a multiple of 8 or
    equal the full batch.  Small batches use a single full-array tile."""
    if bs % 8 != 0:
        return bs
    for tb in (128, 64, 32, 16, 8):
        if bs % tb == 0:
            return tb
    return bs


def pack_params(branch_params, trunk_params):
    """Pack the per-layer (W, b) lists into 5 arrays (one DMA each).
    Do this ONCE outside the hot loop."""
    f32 = jnp.float32
    bw0 = branch_params[0][0].astype(f32)                                       # (m, p)
    bwh = jnp.stack([w for (w, _) in branch_params[1:]]).astype(f32)            # (3, p, p)
    bb = jnp.concatenate([b for (_, b) in branch_params], axis=0).astype(f32)   # (4, p)
    twh = jnp.stack([w for (w, _) in trunk_params[1:]]).astype(f32)             # (3, p, p)
    tsmall = jnp.concatenate(
        [trunk_params[0][0]] + [b for (_, b) in trunk_params], axis=0
    ).astype(f32)                                                               # (5, p)
    return bw0, bwh, bb, twh, tsmall


# ------------------------------ wrapper --------------------------------------
def deeponet_forward(branch_inputs, trunk_inputs, packed_params):
    """
    branch_inputs : (bs, 1, m)
    trunk_inputs  : (bs, neval, 1)
    packed_params : output of pack_params()
    returns       : (bs, neval) float32
    """
    bw0, bwh, bb, twh, tsmall = packed_params
    bs, one, m = branch_inputs.shape
    assert one == 1
    neval = trunk_inputs.shape[1]

    bx = branch_inputs.reshape(bs, m).astype(jnp.float32)
    tx = trunk_inputs.reshape(bs * neval, 1).astype(jnp.float32)

    tb = _batch_tile(bs)
    assert bs % tb == 0
    nb = bs // tb

    # NOTE: for production sizes, additionally tile neval (second grid axis) and
    # cache branch_out in a VMEM scratch, and cast MXU operands to bf16 on
    # v6e/v7x.  Not needed at these shapes.
    grid_spec = pltpu.PrefetchScalarGridSpec(
        num_scalar_prefetch=0,
        grid=(nb,),
        in_specs=[
            # batch-tiled activations
            pl.BlockSpec((tb, m), lambda i: (i, 0)),
            pl.BlockSpec((tb * neval, 1), lambda i: (i, 0)),
            # parameters: constant block index -> fetched once, resident in VMEM
            pl.BlockSpec(bw0.shape, lambda i: (0, 0)),
            pl.BlockSpec(bwh.shape, lambda i: (0, 0, 0)),
            pl.BlockSpec(bb.shape, lambda i: (0, 0)),
            pl.BlockSpec(twh.shape, lambda i: (0, 0, 0)),
            pl.BlockSpec(tsmall.shape, lambda i: (0, 0)),
        ],
        out_specs=pl.BlockSpec((tb, neval), lambda i: (i, 0)),
    )

    return pl.pallas_call(
        deeponet_kernel,
        out_shape=jax.ShapeDtypeStruct((bs, neval), jnp.float32),
        grid_spec=grid_spec,
        compiler_params=pltpu.CompilerParams(
            dimension_semantics=("parallel",)),   # shard batch tiles over TCs on v7x
    )(bx, tx, bw0, bwh, bb, twh, tsmall)


# --------------------------- parameter init ----------------------------------
def init_dense_params(key, layersizes):
    """PyTorch-Linear-style uniform(-1/sqrt(fan_in), 1/sqrt(fan_in)) init."""
    params = []
    for fan_in, fan_out in zip(layersizes[:-1], layersizes[1:]):
        key, kw, kb = jax.random.split(key, 3)
        bound = 1.0 / jnp.sqrt(jnp.float32(fan_in))
        w = jax.random.uniform(kw, (fan_in, fan_out), jnp.float32, -bound, bound)
        b = jax.random.uniform(kb, (1, fan_out), jnp.float32, -bound, bound)
        params.append((w, b))
    return key, params


# ------------------------- pure-JAX reference --------------------------------
def _reference(branch_inputs, trunk_inputs, branch_params, trunk_params):
    def mlp(x, params):
        n = len(params)
        for i, (w, b) in enumerate(params):
            x = x @ w + b
            if i < n - 1:
                x = jnp.maximum(x, 0.0)
        return x

    bs, _, m = branch_inputs.shape
    neval = trunk_inputs.shape[1]
    b_out = mlp(branch_inputs.reshape(bs, m), branch_params)        # (bs, p)
    t_out = mlp(trunk_inputs.reshape(bs * neval, 1), trunk_params)  # (bs*neval, p)
    t_out = t_out.reshape(bs, neval, -1)
    return jnp.einsum('ik,ilk->il', b_out, t_out)


# --------------------------------- main ---------------------------------------
if __name__ == "__main__":
    key = jax.random.PRNGKey(0)

    key, branch_params = init_dense_params(key, BRANCH_LAYERS)
    key, trunk_params = init_dense_params(key, TRUNK_LAYERS)
    packed = pack_params(branch_params, trunk_params)   # pack once, outside hot loop

    bs = 2                          # batch size
    m = INPUT_NEURONS_BRANCH        # number of sensors
    neval = 8                       # evaluation points per sample

    key, kb, kt = jax.random.split(key, 3)
    branch_inputs = jax.random.normal(kb, (bs, 1, m), jnp.float32)
    trunk_inputs = jax.random.normal(kt, (bs, neval, 1), jnp.float32)

    out = deeponet_forward(branch_inputs, trunk_inputs, packed)
    out = jax.block_until_ready(out)

    ref = _reference(branch_inputs, trunk_inputs, branch_params, trunk_params)
    assert out.shape == (bs, neval)
    assert jnp.allclose(out, ref, rtol=1e-4, atol=1e-4), "mismatch vs reference"

    print("KERNEL_OK")
</pallas_src>

<mosaic_0001>
module attributes {stable_mosaic.version = 11 : i64} {
  func.func @deeponet_kernel(%arg0: i32, %arg1: memref<2x100xf32, #tpu.memory_space<vmem>>, %arg2: memref<16x1xf32, #tpu.memory_space<vmem>>, %arg3: memref<100x40xf32, #tpu.memory_space<vmem>>, %arg4: memref<3x40x40xf32, #tpu.memory_space<vmem>>, %arg5: memref<4x40xf32, #tpu.memory_space<vmem>>, %arg6: memref<3x40x40xf32, #tpu.memory_space<vmem>>, %arg7: memref<5x40xf32, #tpu.memory_space<vmem>>, %arg8: memref<2x8xf32, #tpu.memory_space<vmem>>) attributes {dimension_semantics = [#tpu.dimension_semantics<parallel>], iteration_bounds = array<i64: 1>, scalar_prefetch = 0 : i64, scratch_operands = 0 : i64, tpu.core_type = #tpu.core_type<tc>, window_params = [{transform_indices = @transform_0, window_bounds = array<i64: 2, 100>}, {transform_indices = @transform_1, window_bounds = array<i64: 16, 1>}, {pipeline_mode = #tpu.pipeline_mode<synchronous>, transform_indices = @transform_2, window_bounds = array<i64: 100, 40>}, {pipeline_mode = #tpu.pipeline_mode<synchronous>, transform_indices = @transform_3, window_bounds = array<i64: 3, 40, 40>}, {pipeline_mode = #tpu.pipeline_mode<synchronous>, transform_indices = @transform_4, window_bounds = array<i64: 4, 40>}, {pipeline_mode = #tpu.pipeline_mode<synchronous>, transform_indices = @transform_5, window_bounds = array<i64: 3, 40, 40>}, {pipeline_mode = #tpu.pipeline_mode<synchronous>, transform_indices = @transform_6, window_bounds = array<i64: 5, 40>}, {transform_indices = @transform_7, window_bounds = array<i64: 2, 8>}]} {
    %c0 = arith.constant 0 : index
    %c0_0 = arith.constant 0 : index
    %0 = vector.load %arg1[%c0, %c0_0] : memref<2x100xf32, #tpu.memory_space<vmem>>, vector<2x100xf32>
    %c0_1 = arith.constant 0 : index
    %c0_2 = arith.constant 0 : index
    %1 = vector.load %arg3[%c0_1, %c0_2] : memref<100x40xf32, #tpu.memory_space<vmem>>, vector<100x40xf32>
    %cst = arith.constant dense<0.000000e+00> : vector<2x40xf32>
    %2 = tpu.matmul %0, %1, %cst {dimension_numbers = #tpu.dot_dimension_numbers<[1], [0], [0], [1], [0, 0, 1, 1], [], []>} : vector<2x100xf32>, vector<100x40xf32>, vector<2x40xf32> -> vector<2x40xf32>
    %c0_3 = arith.constant 0 : index
    %c0_4 = arith.constant 0 : index
    %3 = vector.load %arg5[%c0_3, %c0_4] : memref<4x40xf32, #tpu.memory_space<vmem>>, vector<1x40xf32>
    %4 = vector.broadcast %3 : vector<1x40xf32> to vector<2x40xf32>
    %5 = arith.addf %2, %4 : vector<2x40xf32>
    %cst_5 = arith.constant 0.000000e+00 : f32
    %6 = vector.broadcast %cst_5 : f32 to vector<2x40xf32>
    %7 = arith.maximumf %5, %6 : vector<2x40xf32>
    %c0_6 = arith.constant 0 : index
    %c0_7 = arith.constant 0 : index
    %c0_8 = arith.constant 0 : index
    %8 = vector.load %arg4[%c0_6, %c0_7, %c0_8] : memref<3x40x40xf32, #tpu.memory_space<vmem>>, vector<1x40x40xf32>
    %9 = vector.shape_cast %8 : vector<1x40x40xf32> to vector<40x40xf32>
    %cst_9 = arith.constant dense<0.000000e+00> : vector<2x40xf32>
    %10 = tpu.matmul %7, %9, %cst_9 {dimension_numbers = #tpu.dot_dimension_numbers<[1], [0], [0], [1], [0, 0, 1, 1], [], []>} : vector<2x40xf32>, vector<40x40xf32>, vector<2x40xf32> -> vector<2x40xf32>
    %c1 = arith.constant 1 : index
    %c0_10 = arith.constant 0 : index
    %11 = vector.load %arg5[%c1, %c0_10] : memref<4x40xf32, #tpu.memory_space<vmem>>, vector<1x40xf32>
    %12 = vector.broadcast %11 : vector<1x40xf32> to vector<2x40xf32>
    %13 = arith.addf %10, %12 : vector<2x40xf32>
    %cst_11 = arith.constant 0.000000e+00 : f32
    %14 = vector.broadcast %cst_11 : f32 to vector<2x40xf32>
    %15 = arith.maximumf %13, %14 : vector<2x40xf32>
    %c1_12 = arith.constant 1 : index
    %c0_13 = arith.constant 0 : index
    %c0_14 = arith.constant 0 : index
    %16 = vector.load %arg4[%c1_12, %c0_13, %c0_14] : memref<3x40x40xf32, #tpu.memory_space<vmem>>, vector<1x40x40xf32>
    %17 = vector.shape_cast %16 : vector<1x40x40xf32> to vector<40x40xf32>
    %cst_15 = arith.constant dense<0.000000e+00> : vector<2x40xf32>
    %18 = tpu.matmul %15, %17, %cst_15 {dimension_numbers = #tpu.dot_dimension_numbers<[1], [0], [0], [1], [0, 0, 1, 1], [], []>} : vector<2x40xf32>, vector<40x40xf32>, vector<2x40xf32> -> vector<2x40xf32>
    %c2 = arith.constant 2 : index
    %c0_16 = arith.constant 0 : index
    %19 = vector.load %arg5[%c2, %c0_16] : memref<4x40xf32, #tpu.memory_space<vmem>>, vector<1x40xf32>
    %20 = vector.broadcast %19 : vector<1x40xf32> to vector<2x40xf32>
    %21 = arith.addf %18, %20 : vector<2x40xf32>
    %cst_17 = arith.constant 0.000000e+00 : f32
    %22 = vector.broadcast %cst_17 : f32 to vector<2x40xf32>
    %23 = arith.maximumf %21, %22 : vector<2x40xf32>
    %c2_18 = arith.constant 2 : index
    %c0_19 = arith.constant 0 : index
    %c0_20 = arith.constant 0 : index
    %24 = vector.load %arg4[%c2_18, %c0_19, %c0_20] : memref<3x40x40xf32, #tpu.memory_space<vmem>>, vector<1x40x40xf32>
    %25 = vector.shape_cast %24 : vector<1x40x40xf32> to vector<40x40xf32>
    %cst_21 = arith.constant dense<0.000000e+00> : vector<2x40xf32>
    %26 = tpu.matmul %23, %25, %cst_21 {dimension_numbers = #tpu.dot_dimension_numbers<[1], [0], [0], [1], [0, 0, 1, 1], [], []>} : vector<2x40xf32>, vector<40x40xf32>, vector<2x40xf32> -> vector<2x40xf32>
    %c3 = arith.constant 3 : index
    %c0_22 = arith.constant 0 : index
    %27 = vector.load %arg5[%c3, %c0_22] : memref<4x40xf32, #tpu.memory_space<vmem>>, vector<1x40xf32>
    %28 = vector.broadcast %27 : vector<1x40xf32> to vector<2x40xf32>
    %29 = arith.addf %26, %28 : vector<2x40xf32>
    %c0_23 = arith.constant 0 : index
    %c0_24 = arith.constant 0 : index
    %30 = vector.load %arg2[%c0_23, %c0_24] : memref<16x1xf32, #tpu.memory_space<vmem>>, vector<16x1xf32>
    %c0_25 = arith.constant 0 : index
    %c0_26 = arith.constant 0 : index
    %31 = vector.load %arg7[%c0_25, %c0_26] : memref<5x40xf32, #tpu.memory_space<vmem>>, vector<1x40xf32>
    %32 = vector.broadcast %30 : vector<16x1xf32> to vector<16x40xf32>
    %33 = vector.broadcast %31 : vector<1x40xf32> to vector<16x40xf32>
    %34 = arith.mulf %32, %33 : vector<16x40xf32>
    %c1_27 = arith.constant 1 : index
    %c0_28 = arith.constant 0 : index
    %35 = vector.load %arg7[%c1_27, %c0_28] : memref<5x40xf32, #tpu.memory_space<vmem>>, vector<1x40xf32>
    %36 = vector.broadcast %35 : vector<1x40xf32> to vector<16x40xf32>
    %37 = arith.addf %34, %36 : vector<16x40xf32>
    %cst_29 = arith.constant 0.000000e+00 : f32
    %38 = vector.broadcast %cst_29 : f32 to vector<16x40xf32>
    %39 = arith.maximumf %37, %38 : vector<16x40xf32>
    %c0_30 = arith.constant 0 : index
    %c0_31 = arith.constant 0 : index
    %c0_32 = arith.constant 0 : index
    %40 = vector.load %arg6[%c0_30, %c0_31, %c0_32] : memref<3x40x40xf32, #tpu.memory_space<vmem>>, vector<1x40x40xf32>
    %41 = vector.shape_cast %40 : vector<1x40x40xf32> to vector<40x40xf32>
    %cst_33 = arith.constant dense<0.000000e+00> : vector<16x40xf32>
    %42 = tpu.matmul %39, %41, %cst_33 {dimension_numbers = #tpu.dot_dimension_numbers<[1], [0], [0], [1], [0, 0, 1, 1], [], []>} : vector<16x40xf32>, vector<40x40xf32>, vector<16x40xf32> -> vector<16x40xf32>
    %c2_34 = arith.constant 2 : index
    %c0_35 = arith.constant 0 : index
    %43 = vector.load %arg7[%c2_34, %c0_35] : memref<5x40xf32, #tpu.memory_space<vmem>>, vector<1x40xf32>
    %44 = vector.broadcast %43 : vector<1x40xf32> to vector<16x40xf32>
    %45 = arith.addf %42, %44 : vector<16x40xf32>
    %cst_36 = arith.constant 0.000000e+00 : f32
    %46 = vector.broadcast %cst_36 : f32 to vector<16x40xf32>
    %47 = arith.maximumf %45, %46 : vector<16x40xf32>
    %c1_37 = arith.constant 1 : index
    %c0_38 = arith.constant 0 : index
    %c0_39 = arith.constant 0 : index
    %48 = vector.load %arg6[%c1_37, %c0_38, %c0_39] : memref<3x40x40xf32, #tpu.memory_space<vmem>>, vector<1x40x40xf32>
    %49 = vector.shape_cast %48 : vector<1x40x40xf32> to vector<40x40xf32>
    %cst_40 = arith.constant dense<0.000000e+00> : vector<16x40xf32>
    %50 = tpu.matmul %47, %49, %cst_40 {dimension_numbers = #tpu.dot_dimension_numbers<[1], [0], [0], [1], [0, 0, 1, 1], [], []>} : vector<16x40xf32>, vector<40x40xf32>, vector<16x40xf32> -> vector<16x40xf32>
    %c3_41 = arith.constant 3 : index
    %c0_42 = arith.constant 0 : index
    %51 = vector.load %arg7[%c3_41, %c0_42] : memref<5x40xf32, #tpu.memory_space<vmem>>, vector<1x40xf32>
    %52 = vector.broadcast %51 : vector<1x40xf32> to vector<16x40xf32>
    %53 = arith.addf %50, %52 : vector<16x40xf32>
    %cst_43 = arith.constant 0.000000e+00 : f32
    %54 = vector.broadcast %cst_43 : f32 to vector<16x40xf32>
    %55 = arith.maximumf %53, %54 : vector<16x40xf32>
    %c2_44 = arith.constant 2 : index
    %c0_45 = arith.constant 0 : index
    %c0_46 = arith.constant 0 : index
    %56 = vector.load %arg6[%c2_44, %c0_45, %c0_46] : memref<3x40x40xf32, #tpu.memory_space<vmem>>, vector<1x40x40xf32>
    %57 = vector.shape_cast %56 : vector<1x40x40xf32> to vector<40x40xf32>
    %cst_47 = arith.constant dense<0.000000e+00> : vector<16x40xf32>
    %58 = tpu.matmul %55, %57, %cst_47 {dimension_numbers = #tpu.dot_dimension_numbers<[1], [0], [0], [1], [0, 0, 1, 1], [], []>} : vector<16x40xf32>, vector<40x40xf32>, vector<16x40xf32> -> vector<16x40xf32>
    %c4 = arith.constant 4 : index
    %c0_48 = arith.constant 0 : index
    %59 = vector.load %arg7[%c4, %c0_48] : memref<5x40xf32, #tpu.memory_space<vmem>>, vector<1x40xf32>
    %60 = vector.broadcast %59 : vector<1x40xf32> to vector<16x40xf32>
    %61 = arith.addf %58, %60 : vector<16x40xf32>
    %62 = vector.extract_strided_slice %61 {offsets = [0, 0], sizes = [8, 40], strides = [1, 1]} : vector<16x40xf32> to vector<8x40xf32>
    %63 = vector.extract_strided_slice %29 {offsets = [0, 0], sizes = [1, 40], strides = [1, 1]} : vector<2x40xf32> to vector<1x40xf32>
    %cst_49 = arith.constant dense<0.000000e+00> : vector<1x8xf32>
    %64 = tpu.matmul %63, %62, %cst_49 {dimension_numbers = #tpu.dot_dimension_numbers<[1], [1], [0], [0], [0, 0, 1, 0], [], []>} : vector<1x40xf32>, vector<8x40xf32>, vector<1x8xf32> -> vector<1x8xf32>
    %c0_50 = arith.constant 0 : index
    %c0_51 = arith.constant 0 : index
    %65 = vector.load %arg8[%c0_50, %c0_51] : memref<2x8xf32, #tpu.memory_space<vmem>>, vector<1x8xf32>
    tpu.vector_store %arg8[%c0_50, %c0_51], %64 {strides = array<i32>} : memref<2x8xf32, #tpu.memory_space<vmem>>, vector<1x8xf32>,
    %66 = vector.extract_strided_slice %61 {offsets = [8, 0], sizes = [8, 40], strides = [1, 1]} : vector<16x40xf32> to vector<8x40xf32>
    %67 = vector.extract_strided_slice %29 {offsets = [1, 0], sizes = [1, 40], strides = [1, 1]} : vector<2x40xf32> to vector<1x40xf32>
    %cst_52 = arith.constant dense<0.000000e+00> : vector<1x8xf32>
    %68 = tpu.matmul %67, %66, %cst_52 {dimension_numbers = #tpu.dot_dimension_numbers<[1], [1], [0], [0], [0, 0, 1, 0], [], []>} : vector<1x40xf32>, vector<8x40xf32>, vector<1x8xf32> -> vector<1x8xf32>
    %c1_53 = arith.constant 1 : index
    %c0_54 = arith.constant 0 : index
    %69 = vector.load %arg8[%c1_53, %c0_54] : memref<2x8xf32, #tpu.memory_space<vmem>>, vector<1x8xf32>
    tpu.vector_store %arg8[%c1_53, %c0_54], %68 {strides = array<i32>} : memref<2x8xf32, #tpu.memory_space<vmem>>, vector<1x8xf32>,
    return
  }
  func.func @transform_0(%arg0: i32) -> (i32, i32) {
    %c0_i32 = arith.constant 0 : i32
    %c0_i32_0 = arith.constant 0 : i32
    return %arg0, %c0_i32 : i32, i32
  }
  func.func @transform_1(%arg0: i32) -> (i32, i32) {
    %c0_i32 = arith.constant 0 : i32
    %c0_i32_0 = arith.constant 0 : i32
    return %arg0, %c0_i32 : i32, i32
  }
  func.func @transform_2(%arg0: i32) -> (i32, i32) {
    %c0_i32 = arith.constant 0 : i32
    %c0_i32_0 = arith.constant 0 : i32
    %c0_i32_1 = arith.constant 0 : i32
    return %c0_i32, %c0_i32_0 : i32, i32
  }
  func.func @transform_3(%arg0: i32) -> (i32, i32, i32) {
    %c0_i32 = arith.constant 0 : i32
    %c0_i32_0 = arith.constant 0 : i32
    %c0_i32_1 = arith.constant 0 : i32
    %c0_i32_2 = arith.constant 0 : i32
    return %c0_i32, %c0_i32_0, %c0_i32_1 : i32, i32, i32
  }
  func.func @transform_4(%arg0: i32) -> (i32, i32) {
    %c0_i32 = arith.constant 0 : i32
    %c0_i32_0 = arith.constant 0 : i32
    %c0_i32_1 = arith.constant 0 : i32
    return %c0_i32, %c0_i32_0 : i32, i32
  }
  func.func @transform_5(%arg0: i32) -> (i32, i32, i32) {
    %c0_i32 = arith.constant 0 : i32
    %c0_i32_0 = arith.constant 0 : i32
    %c0_i32_1 = arith.constant 0 : i32
    %c0_i32_2 = arith.constant 0 : i32
    return %c0_i32, %c0_i32_0, %c0_i32_1 : i32, i32, i32
  }
  func.func @transform_6(%arg0: i32) -> (i32, i32) {
    %c0_i32 = arith.constant 0 : i32
    %c0_i32_0 = arith.constant 0 : i32
    %c0_i32_1 = arith.constant 0 : i32
    return %c0_i32, %c0_i32_0 : i32, i32
  }
  func.func @transform_7(%arg0: i32) -> (i32, i32) {
    %c0_i32 = arith.constant 0 : i32
    %c0_i32_0 = arith.constant 0 : i32
    return %arg0, %c0_i32 : i32, i32
  }
}

</mosaic_0001>

<llo_original>
// kernel: tpu_custom_call.1
$region0: #{tpu_custom_call.1}
  #allocation0 [shape = 'u32[]', space=smem, size = 0x4, offset = 0x4, fixed_abs, tag = 'smem constant byte address 0x4 - core index']
  #allocation1 [shape = 'u32[144,128]{1,0:T(1,128)}', space=vmem, size = 0x12000, scoped, tag = 'internal scratch']
  %s0 = inlined_call_operand.vmem [shape: f32[2,100], index: 0, kind: input, shape index: {}]
  %s1 = inlined_call_operand.vmem [shape: f32[16,1], index: 1, kind: input, shape index: {}]
  %s2 = inlined_call_operand.vmem [shape: f32[100,40], index: 2, kind: input, shape index: {}]
  %s3 = inlined_call_operand.vmem [shape: f32[3,40,40], index: 3, kind: input, shape index: {}]
  %s4 = inlined_call_operand.vmem [shape: f32[4,40], index: 4, kind: input, shape index: {}]
  %s5 = inlined_call_operand.hbm [shape: f32[3,40,40], index: 5, kind: input, shape index: {}]
  %s6 = inlined_call_operand.vmem [shape: f32[5,40], index: 6, kind: input, shape index: {}]
  %s7 = inlined_call_operand.hbm [shape: f32[2,8], index: 7, kind: output, shape index: {}]
  %s8 = sld [smem:[#allocation0]]
  $region42: #{tpu_custom_call.1} parent=0
    _
  %s10 = ssub.s32 1, %s8
  %s11 = scalar_select 0, %s10, %s8
  $region1: #{tpu_custom_call.1} parent=0
    #allocation2 [shape = 'u8[61440]{0}', space=vmem, size = 0xf000, scoped, tag = 'input window, operand 5, single buffered']
    #allocation3 [shape = 's32[1]{0}', space=sflag, size = 0x4, scoped, tag = 'scoped memory for tpu_custom_call.1']
    #allocation4 [shape = 's32[1]{0}', space=sflag, size = 0x4, scoped, tag = 'scoped memory for tpu_custom_call.1']
    #allocation5 [shape = 'u8[1024]{0}', space=vmem, size = 0x400, scoped, tag = 'output window, operand 0, single buffered']
    %12 = vsyncpa [#allocation3], 0
    %13 = vsyncpa [#allocation4], 0
    // Predicated region
    $region2: #{tpu_custom_call.1} parent=1 // pred_check
      _
    $region3: #{tpu_custom_call.1} parent=1 // pred_check_branch
      %15 = sbr.rel (0) target = $region5
    $region4: #{tpu_custom_call.1} parent=1 // pred_region
      _
    $region5: #{tpu_custom_call.1} parent=1 // pred_fallthru
      _
    // Predicated region
    $region6: #{tpu_custom_call.1} parent=1 // pred_check
      _
    $region7: #{tpu_custom_call.1} parent=1 // pred_check_branch
      %17 = sbr.rel (0) target = $region9
    $region8: #{tpu_custom_call.1} parent=1 // pred_region
      _
    $region9: #{tpu_custom_call.1} parent=1 // pred_fallthru
      _
    // Predicated region
    $region10: #{tpu_custom_call.1} parent=1 // pred_check
      _
    $region11: #{tpu_custom_call.1} parent=1 // pred_check_branch
      %19 = sbr.rel (0) target = $region13
    $region12: #{tpu_custom_call.1} parent=1 // pred_region
      _
    $region13: #{tpu_custom_call.1} parent=1 // pred_fallthru
      _
    // Predicated region
    $region14: #{tpu_custom_call.1} parent=1 // pred_check
      _
    $region15: #{tpu_custom_call.1} parent=1 // pred_check_branch
      %21 = sbr.rel (0) target = $region17
    $region16: #{tpu_custom_call.1} parent=1 // pred_region
      _
    $region17: #{tpu_custom_call.1} parent=1 // pred_fallthru
      _
    // Predicated region
    $region18: #{tpu_custom_call.1} parent=1 // pred_check
      _
    $region19: #{tpu_custom_call.1} parent=1 // pred_check_branch
      %23 = sbr.rel (0) target = $region21
    $region20: #{tpu_custom_call.1} parent=1 // pred_region
      _
    $region21: #{tpu_custom_call.1} parent=1 // pred_fallthru
      _
    // Predicated region
    $region22: #{tpu_custom_call.1} parent=1 // pred_check
      _
    $region23: #{tpu_custom_call.1} parent=1 // pred_check_branch
      %25 = sbr.rel (0) target = $region25
    $region24: #{tpu_custom_call.1} parent=1 // pred_region
      %s27 = ssub.s32 1920, 1920
      %28 = vsyncadd [#allocation3], %s27
      %s29 = sshll.u32 [#allocation2], 4
      %s30 = int_to_ptr.vmem [resolvable:$true] %s29
      %35 = dma.hbm_to_vmem [thread:$0]  %s5, 1920, %s30, [#allocation3], 128, 128, 8
    $region25: #{tpu_custom_call.1} parent=1 // pred_fallthru
      _
    // Predicated region
    $region26: #{tpu_custom_call.1} parent=1 // pred_check
      _
    $region27: #{tpu_custom_call.1} parent=1 // pred_check_branch
      %37 = sbr.rel (0) target = $region29
    $region28: #{tpu_custom_call.1} parent=1 // pred_region
      _
    $region29: #{tpu_custom_call.1} parent=1 // pred_fallthru
      _
    // Predicated region
    $region30: #{tpu_custom_call.1} parent=1 // pred_check
      _
    $region31: #{tpu_custom_call.1} parent=1 // pred_check_branch
      %39 = sbr.rel (0) target = $region33
    $region32: #{tpu_custom_call.1} parent=1 // pred_region
      %40 = dma.done [#allocation3], 1920
    $region33: #{tpu_custom_call.1} parent=1 // pred_fallthru
      _
    %v41 = vld [vmem:[%s0] sm:$0x3]
    %v42 = vld [vmem:[%s2] sm:$0xff]
    %v43 = vld [vmem:[%s2 + $0x8] sm:$0xff]
    %v44 = vld [vmem:[%s2 + $0x10] sm:$0xff]
    %v45 = vld [vmem:[%s2 + $0x18] sm:$0xff]
    %v46 = vld [vmem:[%s2 + $0x20] sm:$0xff]
    %v47 = vld [vmem:[%s2 + $0x28] sm:$0xff]
    %v48 = vld [vmem:[%s2 + $0x30] sm:$0xff]
    %v49 = vld [vmem:[%s2 + $0x38] sm:$0xff]
    %v50 = vld [vmem:[%s2 + $0x40] sm:$0xff]
    %v51 = vld [vmem:[%s2 + $0x48] sm:$0xff]
    %v52 = vld [vmem:[%s2 + $0x50] sm:$0xff]
    %v53 = vld [vmem:[%s2 + $0x58] sm:$0xff]
    %v54 = vld [vmem:[%s2 + $0x60] sm:$0xf]
    %v55 = vld [vmem:[%s4] sm:$0x1]
    %v56 = vlaneseq
    %v57 = vshrl.u32 %v56, 7
    %v58 = vsub.s32 0, %v57
    %v59 = vrot.slane %v55, %v58
    %vm60 = vcmask 818176
    %v62 = vsel %vm60, %v41, 0
    %vm64 = vcmask 1043456
    %v66 = vsel %vm64, %v54, 0
    %68 = vmatprep.subr.mxu0 0.0
    %69 = vmatpush1.msra.mxu0 0.0
    %70 = vmatprep.subr.mxu0 0.0
    %71 = vmatpush1.msra.mxu0 0.0
    %72 = vmatprep.subr.mxu0 0.0
    %73 = vmatpush1.msra.mxu0 0.0
    %74 = vmatprep.subr.mxu0 0.0
    %75 = vmatpush1.msra.mxu0 %v66
    %76 = vmatprep.subr.mxu0 0.0
    %77 = vmatpush1.msra.mxu0 %v53
    %78 = vmatprep.subr.mxu0 0.0
    %79 = vmatpush1.msra.mxu0 %v52
    %80 = vmatprep.subr.mxu0 0.0
    %81 = vmatpush1.msra.mxu0 %v51
    %82 = vmatprep.subr.mxu0 0.0
    %83 = vmatpush1.msra.mxu0 %v50
    %84 = vmatprep.subr.mxu0 0.0
    %85 = vmatpush1.msra.mxu0 %v49
    %86 = vmatprep.subr.mxu0 0.0
    %87 = vmatpush1.msra.mxu0 %v48
    %88 = vmatprep.subr.mxu0 0.0
    %89 = vmatpush1.msra.mxu0 %v47
    %90 = vmatprep.subr.mxu0 0.0
    %91 = vmatpush1.msra.mxu0 %v46
    %92 = vmatprep.subr.mxu0 0.0
    %93 = vmatpush1.msra.mxu0 %v45
    %94 = vmatprep.subr.mxu0 0.0
    %95 = vmatpush1.msra.mxu0 %v44
    %96 = vmatprep.subr.mxu0 0.0
    %97 = vmatpush1.msra.mxu0 %v43
    %98 = vmatprep.subr.mxu0 0.0
    %99 = vmatpush1.msra.mxu0 %v42
    %100 = vmatprep.subr.mxu0 0.0
    %101 = vmatpush2.msra.mxu0 0.0
    %102 = vmatprep.subr.mxu0 0.0
    %103 = vmatpush2.msra.mxu0 0.0
    %104 = vmatprep.subr.mxu0 0.0
    %105 = vmatpush2.msra.mxu0 0.0
    %106 = vmatprep.subr.mxu0 0.0
    %107 = vmatpush2.msra.mxu0 0.0
    %108 = vmatprep.subr.mxu0 0.0
    %109 = vmatpush2.msra.mxu0 0.0
    %110 = vmatprep.subr.mxu0 0.0
    %111 = vmatpush2.msra.mxu0 0.0
    %112 = vmatprep.subr.mxu0 0.0
    %113 = vmatpush2.msra.mxu0 0.0
    %114 = vmatprep.subr.mxu0 0.0
    %115 = vmatpush2.msra.mxu0 0.0
    %116 = vmatprep.subr.mxu0 0.0
    %117 = vmatpush2.msra.mxu0 0.0
    %118 = vmatprep.subr.mxu0 0.0
    %119 = vmatpush2.msra.mxu0 0.0
    %120 = vmatprep.subr.mxu0 0.0
    %121 = vmatpush2.msra.mxu0 0.0
    %122 = vmatprep.subr.mxu0 0.0
    %123 = vmatpush2.msra.mxu0 0.0
    %124 = vmatprep.subr.mxu0 0.0
    %125 = vmatpush2.msra.mxu0 0.0
    %126 = vmatprep.subr.mxu0 0.0
    %127 = vmatpush2.msra.mxu0 0.0
    %128 = vmatprep.subr.mxu0 0.0
    %129 = vmatpush2.msra.mxu0 0.0
    %130 = vmatprep.subr.mxu0 0.0
    %131 = vmatpush2.msra.mxu0 0.0
    %132 = vmatprep.mubr.f32.mxu0 0.0
    %133 = vmatmul.mubr.f32.gmra.mxu0 %v62
    %v134 = vpop.f32.mrf.mxu0
    %v135 = vadd.f32 %v59, %v134
    %v136 = vpop.f32.mrf.mxu0
    %137 = vdwg.mxu0
    %v138 = vmax.f32 %v135, 0.0
    %v139 = vld [vmem:[%s3] sm:$0xff]
    %v140 = vld [vmem:[%s3 + $0x8] sm:$0xff]
    %v141 = vld [vmem:[%s3 + $0x10] sm:$0xff]
    %v142 = vld [vmem:[%s3 + $0x18] sm:$0xff]
    %v143 = vld [vmem:[%s3 + $0x20] sm:$0xff]
    %v144 = vld [vmem:[%s4 + $0x1] sm:$0x1]
    %v145 = vlaneseq
    %v146 = vshrl.u32 %v145, 7
    %v147 = vsub.s32 0, %v146
    %v148 = vrot.slane %v144, %v147
    %vm149 = vcmask 326656
    %v151 = vsel %vm149, %v138, 0
    %153 = vmatprep.subr.mxu0 0.0
    %154 = vmatpush1.msra.mxu0 0.0
    %155 = vmatprep.subr.mxu0 0.0
    %156 = vmatpush1.msra.mxu0 0.0
    %157 = vmatprep.subr.mxu0 0.0
    %158 = vmatpush1.msra.mxu0 0.0
    %159 = vmatprep.subr.mxu0 0.0
    %160 = vmatpush1.msra.mxu0 0.0
    %161 = vmatprep.subr.mxu0 0.0
    %162 = vmatpush1.msra.mxu0 0.0
    %163 = vmatprep.subr.mxu0 0.0
    %164 = vmatpush1.msra.mxu0 0.0
    %165 = vmatprep.subr.mxu0 0.0
    %166 = vmatpush1.msra.mxu0 0.0
    %167 = vmatprep.subr.mxu0 0.0
    %168 = vmatpush1.msra.mxu0 0.0
    %169 = vmatprep.subr.mxu0 0.0
    %170 = vmatpush1.msra.mxu0 0.0
    %171 = vmatprep.subr.mxu0 0.0
    %172 = vmatpush1.msra.mxu0 0.0
    %173 = vmatprep.subr.mxu0 0.0
    %174 = vmatpush1.msra.mxu0 0.0
    %175 = vmatprep.subr.mxu0 0.0
    %176 = vmatpush1.msra.mxu0 %v143
    %177 = vmatprep.subr.mxu0 0.0
    %178 = vmatpush1.msra.mxu0 %v142
    %179 = vmatprep.subr.mxu0 0.0
    %180 = vmatpush1.msra.mxu0 %v141
    %181 = vmatprep.subr.mxu0 0.0
    %182 = vmatpush1.msra.mxu0 %v140
    %183 = vmatprep.subr.mxu0 0.0
    %184 = vmatpush1.msra.mxu0 %v139
    %185 = vmatprep.subr.mxu0 0.0
    %186 = vmatpush2.msra.mxu0 0.0
    %187 = vmatprep.subr.mxu0 0.0
    %188 = vmatpush2.msra.mxu0 0.0
    %189 = vmatprep.subr.mxu0 0.0
    %190 = vmatpush2.msra.mxu0 0.0
    %191 = vmatprep.subr.mxu0 0.0
    %192 = vmatpush2.msra.mxu0 0.0
    %193 = vmatprep.subr.mxu0 0.0
    %194 = vmatpush2.msra.mxu0 0.0
    %195 = vmatprep.subr.mxu0 0.0
    %196 = vmatpush2.msra.mxu0 0.0
    %197 = vmatprep.subr.mxu0 0.0
    %198 = vmatpush2.msra.mxu0 0.0
    %199 = vmatprep.subr.mxu0 0.0
    %200 = vmatpush2.msra.mxu0 0.0
    %201 = vmatprep.subr.mxu0 0.0
    %202 = vmatpush2.msra.mxu0 0.0
    %203 = vmatprep.subr.mxu0 0.0
    %204 = vmatpush2.msra.mxu0 0.0
    %205 = vmatprep.subr.mxu0 0.0
    %206 = vmatpush2.msra.mxu0 0.0
    %207 = vmatprep.subr.mxu0 0.0
    %208 = vmatpush2.msra.mxu0 0.0
    %209 = vmatprep.subr.mxu0 0.0
    %210 = vmatpush2.msra.mxu0 0.0
    %211 = vmatprep.subr.mxu0 0.0
    %212 = vmatpush2.msra.mxu0 0.0
    %213 = vmatprep.subr.mxu0 0.0
    %214 = vmatpush2.msra.mxu0 0.0
    %215 = vmatprep.subr.mxu0 0.0
    %216 = vmatpush2.msra.mxu0 0.0
    %217 = vmatprep.mubr.f32.mxu0 0.0
    %218 = vmatmul.mubr.f32.gmra.mxu0 %v151
    %v219 = vpop.f32.mrf.mxu0
    %v220 = vadd.f32 %v148, %v219
    %v221 = vpop.f32.mrf.mxu0
    %222 = vdwg.mxu0
    %v223 = vmax.f32 %v220, 0.0
    %s224 = scalar_lea.vmem %s3, 40
    %v225 = vld [vmem:[%s224] sm:$0xff]
    %v226 = vld [vmem:[%s224 + $0x8] sm:$0xff]
    %v227 = vld [vmem:[%s224 + $0x10] sm:$0xff]
    %v228 = vld [vmem:[%s224 + $0x18] sm:$0xff]
    %v229 = vld [vmem:[%s224 + $0x20] sm:$0xff]
    %v230 = vld [vmem:[%s4 + $0x2] sm:$0x1]
    %v231 = vlaneseq
    %v232 = vshrl.u32 %v231, 7
    %v233 = vsub.s32 0, %v232
    %v234 = vrot.slane %v230, %v233
    %v236 = vsel %vm149, %v223, 0
    %238 = vmatprep.subr.mxu0 0.0
    %239 = vmatpush1.msra.mxu0 0.0
    %240 = vmatprep.subr.mxu0 0.0
    %241 = vmatpush1.msra.mxu0 0.0
    %242 = vmatprep.subr.mxu0 0.0
    %243 = vmatpush1.msra.mxu0 0.0
    %244 = vmatprep.subr.mxu0 0.0
    %245 = vmatpush1.msra.mxu0 0.0
    %246 = vmatprep.subr.mxu0 0.0
    %247 = vmatpush1.msra.mxu0 0.0
    %248 = vmatprep.subr.mxu0 0.0
    %249 = vmatpush1.msra.mxu0 0.0
    %250 = vmatprep.subr.mxu0 0.0
    %251 = vmatpush1.msra.mxu0 0.0
    %252 = vmatprep.subr.mxu0 0.0
    %253 = vmatpush1.msra.mxu0 0.0
    %254 = vmatprep.subr.mxu0 0.0
    %255 = vmatpush1.msra.mxu0 0.0
    %256 = vmatprep.subr.mxu0 0.0
    %257 = vmatpush1.msra.mxu0 0.0
    %258 = vmatprep.subr.mxu0 0.0
    %259 = vmatpush1.msra.mxu0 0.0
    %260 = vmatprep.subr.mxu0 0.0
    %261 = vmatpush1.msra.mxu0 %v229
    %262 = vmatprep.subr.mxu0 0.0
    %263 = vmatpush1.msra.mxu0 %v228
    %264 = vmatprep.subr.mxu0 0.0
    %265 = vmatpush1.msra.mxu0 %v227
    %266 = vmatprep.subr.mxu0 0.0
    %267 = vmatpush1.msra.mxu0 %v226
    %268 = vmatprep.subr.mxu0 0.0
    %269 = vmatpush1.msra.mxu0 %v225
    %270 = vmatprep.subr.mxu0 0.0
    %271 = vmatpush2.msra.mxu0 0.0
    %272 = vmatprep.subr.mxu0 0.0
    %273 = vmatpush2.msra.mxu0 0.0
    %274 = vmatprep.subr.mxu0 0.0
    %275 = vmatpush2.msra.mxu0 0.0
    %276 = vmatprep.subr.mxu0 0.0
    %277 = vmatpush2.msra.mxu0 0.0
    %278 = vmatprep.subr.mxu0 0.0
    %279 = vmatpush2.msra.mxu0 0.0
    %280 = vmatprep.subr.mxu0 0.0
    %281 = vmatpush2.msra.mxu0 0.0
    %282 = vmatprep.subr.mxu0 0.0
    %283 = vmatpush2.msra.mxu0 0.0
    %284 = vmatprep.subr.mxu0 0.0
    %285 = vmatpush2.msra.mxu0 0.0
    %286 = vmatprep.subr.mxu0 0.0
    %287 = vmatpush2.msra.mxu0 0.0
    %288 = vmatprep.subr.mxu0 0.0
    %289 = vmatpush2.msra.mxu0 0.0
    %290 = vmatprep.subr.mxu0 0.0
    %291 = vmatpush2.msra.mxu0 0.0
    %292 = vmatprep.subr.mxu0 0.0
    %293 = vmatpush2.msra.mxu0 0.0
    %294 = vmatprep.subr.mxu0 0.0
    %295 = vmatpush2.msra.mxu0 0.0
    %296 = vmatprep.subr.mxu0 0.0
    %297 = vmatpush2.msra.mxu0 0.0
    %298 = vmatprep.subr.mxu0 0.0
    %299 = vmatpush2.msra.mxu0 0.0
    %300 = vmatprep.subr.mxu0 0.0
    %301 = vmatpush2.msra.mxu0 0.0
    %302 = vmatprep.mubr.f32.mxu0 0.0
    %303 = vmatmul.mubr.f32.gmra.mxu0 %v236
    %v304 = vpop.f32.mrf.mxu0
    %v305 = vadd.f32 %v234, %v304
    %v306 = vpop.f32.mrf.mxu0
    %307 = vdwg.mxu0
    %v308 = vmax.f32 %v305, 0.0
    %s309 = scalar_lea.vmem %s3, 80
    %v310 = vld [vmem:[%s309] sm:$0xff]
    %v311 = vld [vmem:[%s309 + $0x8] sm:$0xff]
    %v312 = vld [vmem:[%s309 + $0x10] sm:$0xff]
    %v313 = vld [vmem:[%s309 + $0x18] sm:$0xff]
    %v314 = vld [vmem:[%s309 + $0x20] sm:$0xff]
    %v315 = vld [vmem:[%s4 + $0x3] sm:$0x1]
    %v316 = vlaneseq
    %v317 = vshrl.u32 %v316, 7
    %v318 = vsub.s32 0, %v317
    %v319 = vrot.slane %v315, %v318
    %v321 = vsel %vm149, %v308, 0
    %323 = vmatprep.subr.mxu0 0.0
    %324 = vmatpush1.msra.mxu0 0.0
    %325 = vmatprep.subr.mxu0 0.0
    %326 = vmatpush1.msra.mxu0 0.0
    %327 = vmatprep.subr.mxu0 0.0
    %328 = vmatpush1.msra.mxu0 0.0
    %329 = vmatprep.subr.mxu0 0.0
    %330 = vmatpush1.msra.mxu0 0.0
    %331 = vmatprep.subr.mxu0 0.0
    %332 = vmatpush1.msra.mxu0 0.0
    %333 = vmatprep.subr.mxu0 0.0
    %334 = vmatpush1.msra.mxu0 0.0
    %335 = vmatprep.subr.mxu0 0.0
    %336 = vmatpush1.msra.mxu0 0.0
    %337 = vmatprep.subr.mxu0 0.0
    %338 = vmatpush1.msra.mxu0 0.0
    %339 = vmatprep.subr.mxu0 0.0
    %340 = vmatpush1.msra.mxu0 0.0
    %341 = vmatprep.subr.mxu0 0.0
    %342 = vmatpush1.msra.mxu0 0.0
    %343 = vmatprep.subr.mxu0 0.0
    %344 = vmatpush1.msra.mxu0 0.0
    %345 = vmatprep.subr.mxu0 0.0
    %346 = vmatpush1.msra.mxu0 %v314
    %347 = vmatprep.subr.mxu0 0.0
    %348 = vmatpush1.msra.mxu0 %v313
    %349 = vmatprep.subr.mxu0 0.0
    %350 = vmatpush1.msra.mxu0 %v312
    %351 = vmatprep.subr.mxu0 0.0
    %352 = vmatpush1.msra.mxu0 %v311
    %353 = vmatprep.subr.mxu0 0.0
    %354 = vmatpush1.msra.mxu0 %v310
    %355 = vmatprep.subr.mxu0 0.0
    %356 = vmatpush2.msra.mxu0 0.0
    %357 = vmatprep.subr.mxu0 0.0
    %358 = vmatpush2.msra.mxu0 0.0
    %359 = vmatprep.subr.mxu0 0.0
    %360 = vmatpush2.msra.mxu0 0.0
    %361 = vmatprep.subr.mxu0 0.0
    %362 = vmatpush2.msra.mxu0 0.0
    %363 = vmatprep.subr.mxu0 0.0
    %364 = vmatpush2.msra.mxu0 0.0
    %365 = vmatprep.subr.mxu0 0.0
    %366 = vmatpush2.msra.mxu0 0.0
    %367 = vmatprep.subr.mxu0 0.0
    %368 = vmatpush2.msra.mxu0 0.0
    %369 = vmatprep.subr.mxu0 0.0
    %370 = vmatpush2.msra.mxu0 0.0
    %371 = vmatprep.subr.mxu0 0.0
    %372 = vmatpush2.msra.mxu0 0.0
    %373 = vmatprep.subr.mxu0 0.0
    %374 = vmatpush2.msra.mxu0 0.0
    %375 = vmatprep.subr.mxu0 0.0
    %376 = vmatpush2.msra.mxu0 0.0
    %377 = vmatprep.subr.mxu0 0.0
    %378 = vmatpush2.msra.mxu0 0.0
    %379 = vmatprep.subr.mxu0 0.0
    %380 = vmatpush2.msra.mxu0 0.0
    %381 = vmatprep.subr.mxu0 0.0
    %382 = vmatpush2.msra.mxu0 0.0
    %383 = vmatprep.subr.mxu0 0.0
    %384 = vmatpush2.msra.mxu0 0.0
    %385 = vmatprep.subr.mxu0 0.0
    %386 = vmatpush2.msra.mxu0 0.0
    %387 = vmatprep.mubr.f32.mxu0 0.0
    %388 = vmatmul.mubr.f32.gmra.mxu0 %v321
    %v389 = vpop.f32.mrf.mxu0
    %v390 = vadd.f32 %v319, %v389
    %v391 = vpop.f32.mrf.mxu0
    %392 = vdwg.mxu0
    %v393 = vld [vmem:[%s1] sm:$0xff]
    %v394 = vld [vmem:[%s1 + $0x8] sm:$0xff]
    %v395 = vld [vmem:[%s6] sm:$0x1]
    %397 = vset.pattern.permute.xlu0 0
    %398 = vperm.xlu0 %397, %v393
    %v399 = vpop.permute.xlu0 %398
    %402 = vset.pattern.permute.xlu0 0
    %403 = vperm.xlu0 %402, %v394
    %v404 = vpop.permute.xlu0 %403
    %v406 = vlaneseq
    %v407 = vshrl.u32 %v406, 7
    %v408 = vsub.s32 0, %v407
    %v409 = vrot.slane %v395, %v408
    %v410 = vmul.f32 %v399, %v409
    %v411 = vmul.f32 %v404, %v409
    %v412 = vld [vmem:[%s6 + $0x1] sm:$0x1]
    %v413 = vlaneseq
    %v414 = vshrl.u32 %v413, 7
    %v415 = vsub.s32 0, %v414
    %v416 = vrot.slane %v412, %v415
    %v417 = vadd.f32 %v410, %v416
    %v418 = vadd.f32 %v411, %v416
    %v419 = vmax.f32 %v417, 0.0
    %v420 = vmax.f32 %v418, 0.0
    %v421 = vld [vmem:[#allocation2] sm:$0xff]
    %v422 = vld [vmem:[#allocation2 + $0x8] sm:$0xff]
    %v423 = vld [vmem:[#allocation2 + $0x10] sm:$0xff]
    %v424 = vld [vmem:[#allocation2 + $0x18] sm:$0xff]
    %v425 = vld [vmem:[#allocation2 + $0x20] sm:$0xff]
    %v426 = vld [vmem:[%s6 + $0x2] sm:$0x1]
    %v427 = vlaneseq
    %v428 = vshrl.u32 %v427, 7
    %v429 = vsub.s32 0, %v428
    %v430 = vrot.slane %v426, %v429
    %v432 = vsel %vm149, %v419, 0
    %v435 = vsel %vm149, %v420, 0
    %437 = vmatprep.subr.mxu0 0.0
    %438 = vmatpush1.msra.mxu0 0.0
    %439 = vmatprep.subr.mxu0 0.0
    %440 = vmatpush1.msra.mxu0 0.0
    %441 = vmatprep.subr.mxu0 0.0
    %442 = vmatpush1.msra.mxu0 0.0
    %443 = vmatprep.subr.mxu0 0.0
    %444 = vmatpush1.msra.mxu0 0.0
    %445 = vmatprep.subr.mxu0 0.0
    %446 = vmatpush1.msra.mxu0 0.0
    %447 = vmatprep.subr.mxu0 0.0
    %448 = vmatpush1.msra.mxu0 0.0
    %449 = vmatprep.subr.mxu0 0.0
    %450 = vmatpush1.msra.mxu0 0.0
    %451 = vmatprep.subr.mxu0 0.0
    %452 = vmatpush1.msra.mxu0 0.0
    %453 = vmatprep.subr.mxu0 0.0
    %454 = vmatpush1.msra.mxu0 0.0
    %455 = vmatprep.subr.mxu0 0.0
    %456 = vmatpush1.msra.mxu0 0.0
    %457 = vmatprep.subr.mxu0 0.0
    %458 = vmatpush1.msra.mxu0 0.0
    %459 = vmatprep.subr.mxu0 0.0
    %460 = vmatpush1.msra.mxu0 %v425
    %461 = vmatprep.subr.mxu0 0.0
    %462 = vmatpush1.msra.mxu0 %v424
    %463 = vmatprep.subr.mxu0 0.0
    %464 = vmatpush1.msra.mxu0 %v423
    %465 = vmatprep.subr.mxu0 0.0
    %466 = vmatpush1.msra.mxu0 %v422
    %467 = vmatprep.subr.mxu0 0.0
    %468 = vmatpush1.msra.mxu0 %v421
    %469 = vmatprep.subr.mxu0 0.0
    %470 = vmatpush2.msra.mxu0 0.0
    %471 = vmatprep.subr.mxu0 0.0
    %472 = vmatpush2.msra.mxu0 0.0
    %473 = vmatprep.subr.mxu0 0.0
    %474 = vmatpush2.msra.mxu0 0.0
    %475 = vmatprep.subr.mxu0 0.0
    %476 = vmatpush2.msra.mxu0 0.0
    %477 = vmatprep.subr.mxu0 0.0
    %478 = vmatpush2.msra.mxu0 0.0
    %479 = vmatprep.subr.mxu0 0.0
    %480 = vmatpush2.msra.mxu0 0.0
    %481 = vmatprep.subr.mxu0 0.0
    %482 = vmatpush2.msra.mxu0 0.0
    %483 = vmatprep.subr.mxu0 0.0
    %484 = vmatpush2.msra.mxu0 0.0
    %485 = vmatprep.subr.mxu0 0.0
    %486 = vmatpush2.msra.mxu0 0.0
    %487 = vmatprep.subr.mxu0 0.0
    %488 = vmatpush2.msra.mxu0 0.0
    %489 = vmatprep.subr.mxu0 0.0
    %490 = vmatpush2.msra.mxu0 0.0
    %491 = vmatprep.subr.mxu0 0.0
    %492 = vmatpush2.msra.mxu0 0.0
    %493 = vmatprep.subr.mxu0 0.0
    %494 = vmatpush2.msra.mxu0 0.0
    %495 = vmatprep.subr.mxu0 0.0
    %496 = vmatpush2.msra.mxu0 0.0
    %497 = vmatprep.subr.mxu0 0.0
    %498 = vmatpush2.msra.mxu0 0.0
    %499 = vmatprep.subr.mxu0 0.0
    %500 = vmatpush2.msra.mxu0 0.0
    %501 = vmatprep.mubr.f32.mxu0 0.0
    %502 = vmatmul.mubr.f32.gmra.mxu0 %v432
    %v503 = vpop.f32.mrf.mxu0
    %v504 = vadd.f32 %v430, %v503
    %v505 = vpop.f32.mrf.mxu0
    %506 = vmatprep.mubr.f32.mxu0 0.0
    %507 = vmatmul.mubr.f32.gmra.mxu0 %v435
    %v508 = vpop.f32.mrf.mxu0
    %v509 = vadd.f32 %v430, %v508
    %v510 = vpop.f32.mrf.mxu0
    %511 = vdwg.mxu0
    %v512 = vmax.f32 %v504, 0.0
    %v513 = vmax.f32 %v509, 0.0
    %s514 = scalar_lea.vmem [#allocation2], 40
    %v515 = vld [vmem:[%s514] sm:$0xff]
    %v516 = vld [vmem:[%s514 + $0x8] sm:$0xff]
    %v517 = vld [vmem:[%s514 + $0x10] sm:$0xff]
    %v518 = vld [vmem:[%s514 + $0x18] sm:$0xff]
    %v519 = vld [vmem:[%s514 + $0x20] sm:$0xff]
    %v520 = vld [vmem:[%s6 + $0x3] sm:$0x1]
    %v521 = vlaneseq
    %v522 = vshrl.u32 %v521, 7
    %v523 = vsub.s32 0, %v522
    %v524 = vrot.slane %v520, %v523
    %v526 = vsel %vm149, %v512, 0
    %v529 = vsel %vm149, %v513, 0
    %531 = vmatprep.subr.mxu0 0.0
    %532 = vmatpush1.msra.mxu0 0.0
    %533 = vmatprep.subr.mxu0 0.0
    %534 = vmatpush1.msra.mxu0 0.0
    %535 = vmatprep.subr.mxu0 0.0
    %536 = vmatpush1.msra.mxu0 0.0
    %537 = vmatprep.subr.mxu0 0.0
    %538 = vmatpush1.msra.mxu0 0.0
    %539 = vmatprep.subr.mxu0 0.0
    %540 = vmatpush1.msra.mxu0 0.0
    %541 = vmatprep.subr.mxu0 0.0
    %542 = vmatpush1.msra.mxu0 0.0
    %543 = vmatprep.subr.mxu0 0.0
    %544 = vmatpush1.msra.mxu0 0.0
    %545 = vmatprep.subr.mxu0 0.0
    %546 = vmatpush1.msra.mxu0 0.0
    %547 = vmatprep.subr.mxu0 0.0
    %548 = vmatpush1.msra.mxu0 0.0
    %549 = vmatprep.subr.mxu0 0.0
    %550 = vmatpush1.msra.mxu0 0.0
    %551 = vmatprep.subr.mxu0 0.0
    %552 = vmatpush1.msra.mxu0 0.0
    %553 = vmatprep.subr.mxu0 0.0
    %554 = vmatpush1.msra.mxu0 %v519
    %555 = vmatprep.subr.mxu0 0.0
    %556 = vmatpush1.msra.mxu0 %v518
    %557 = vmatprep.subr.mxu0 0.0
    %558 = vmatpush1.msra.mxu0 %v517
    %559 = vmatprep.subr.mxu0 0.0
    %560 = vmatpush1.msra.mxu0 %v516
    %561 = vmatprep.subr.mxu0 0.0
    %562 = vmatpush1.msra.mxu0 %v515
    %563 = vmatprep.subr.mxu0 0.0
    %564 = vmatpush2.msra.mxu0 0.0
    %565 = vmatprep.subr.mxu0 0.0
    %566 = vmatpush2.msra.mxu0 0.0
    %567 = vmatprep.subr.mxu0 0.0
    %568 = vmatpush2.msra.mxu0 0.0
    %569 = vmatprep.subr.mxu0 0.0
    %570 = vmatpush2.msra.mxu0 0.0
    %571 = vmatprep.subr.mxu0 0.0
    %572 = vmatpush2.msra.mxu0 0.0
    %573 = vmatprep.subr.mxu0 0.0
    %574 = vmatpush2.msra.mxu0 0.0
    %575 = vmatprep.subr.mxu0 0.0
    %576 = vmatpush2.msra.mxu0 0.0
    %577 = vmatprep.subr.mxu0 0.0
    %578 = vmatpush2.msra.mxu0 0.0
    %579 = vmatprep.subr.mxu0 0.0
    %580 = vmatpush2.msra.mxu0 0.0
    %581 = vmatprep.subr.mxu0 0.0
    %582 = vmatpush2.msra.mxu0 0.0
    %583 = vmatprep.subr.mxu0 0.0
    %584 = vmatpush2.msra.mxu0 0.0
    %585 = vmatprep.subr.mxu0 0.0
    %586 = vmatpush2.msra.mxu0 0.0
    %587 = vmatprep.subr.mxu0 0.0
    %588 = vmatpush2.msra.mxu0 0.0
    %589 = vmatprep.subr.mxu0 0.0
    %590 = vmatpush2.msra.mxu0 0.0
    %591 = vmatprep.subr.mxu0 0.0
    %592 = vmatpush2.msra.mxu0 0.0
    %593 = vmatprep.subr.mxu0 0.0
    %594 = vmatpush2.msra.mxu0 0.0
    %595 = vmatprep.mubr.f32.mxu0 0.0
    %596 = vmatmul.mubr.f32.gmra.mxu0 %v526
    %v597 = vpop.f32.mrf.mxu0
    %v598 = vadd.f32 %v524, %v597
    %v599 = vpop.f32.mrf.mxu0
    %600 = vmatprep.mubr.f32.mxu0 0.0
    %601 = vmatmul.mubr.f32.gmra.mxu0 %v529
    %v602 = vpop.f32.mrf.mxu0
    %v603 = vadd.f32 %v524, %v602
    %v604 = vpop.f32.mrf.mxu0
    %605 = vdwg.mxu0
    %v606 = vmax.f32 %v598, 0.0
    %v607 = vmax.f32 %v603, 0.0
    %s608 = scalar_lea.vmem [#allocation2], 80
    %v609 = vld [vmem:[%s608] sm:$0xff]
    %v610 = vld [vmem:[%s608 + $0x8] sm:$0xff]
    %v611 = vld [vmem:[%s608 + $0x10] sm:$0xff]
    %v612 = vld [vmem:[%s608 + $0x18] sm:$0xff]
    %v613 = vld [vmem:[%s608 + $0x20] sm:$0xff]
    %v614 = vld [vmem:[%s6 + $0x4] sm:$0x1]
    %v615 = vlaneseq
    %v616 = vshrl.u32 %v615, 7
    %v617 = vsub.s32 0, %v616
    %v618 = vrot.slane %v614, %v617
    %v620 = vsel %vm149, %v606, 0
    %v623 = vsel %vm149, %v607, 0
    %625 = vmatprep.subr.mxu0 0.0
    %626 = vmatpush1.msra.mxu0 0.0
    %627 = vmatprep.subr.mxu0 0.0
    %628 = vmatpush1.msra.mxu0 0.0
    %629 = vmatprep.subr.mxu0 0.0
    %630 = vmatpush1.msra.mxu0 0.0
    %631 = vmatprep.subr.mxu0 0.0
    %632 = vmatpush1.msra.mxu0 0.0
    %633 = vmatprep.subr.mxu0 0.0
    %634 = vmatpush1.msra.mxu0 0.0
    %635 = vmatprep.subr.mxu0 0.0
    %636 = vmatpush1.msra.mxu0 0.0
    %637 = vmatprep.subr.mxu0 0.0
    %638 = vmatpush1.msra.mxu0 0.0
    %639 = vmatprep.subr.mxu0 0.0
    %640 = vmatpush1.msra.mxu0 0.0
    %641 = vmatprep.subr.mxu0 0.0
    %642 = vmatpush1.msra.mxu0 0.0
    %643 = vmatprep.subr.mxu0 0.0
    %644 = vmatpush1.msra.mxu0 0.0
    %645 = vmatprep.subr.mxu0 0.0
    %646 = vmatpush1.msra.mxu0 0.0
    %647 = vmatprep.subr.mxu0 0.0
    %648 = vmatpush1.msra.mxu0 %v613
    %649 = vmatprep.subr.mxu0 0.0
    %650 = vmatpush1.msra.mxu0 %v612
    %651 = vmatprep.subr.mxu0 0.0
    %652 = vmatpush1.msra.mxu0 %v611
    %653 = vmatprep.subr.mxu0 0.0
    %654 = vmatpush1.msra.mxu0 %v610
    %655 = vmatprep.subr.mxu0 0.0
    %656 = vmatpush1.msra.mxu0 %v609
    %657 = vmatprep.subr.mxu0 0.0
    %658 = vmatpush2.msra.mxu0 0.0
    %659 = vmatprep.subr.mxu0 0.0
    %660 = vmatpush2.msra.mxu0 0.0
    %661 = vmatprep.subr.mxu0 0.0
    %662 = vmatpush2.msra.mxu0 0.0
    %663 = vmatprep.subr.mxu0 0.0
    %664 = vmatpush2.msra.mxu0 0.0
    %665 = vmatprep.subr.mxu0 0.0
    %666 = vmatpush2.msra.mxu0 0.0
    %667 = vmatprep.subr.mxu0 0.0
    %668 = vmatpush2.msra.mxu0 0.0
    %669 = vmatprep.subr.mxu0 0.0
    %670 = vmatpush2.msra.mxu0 0.0
    %671 = vmatprep.subr.mxu0 0.0
    %672 = vmatpush2.msra.mxu0 0.0
    %673 = vmatprep.subr.mxu0 0.0
    %674 = vmatpush2.msra.mxu0 0.0
    %675 = vmatprep.subr.mxu0 0.0
    %676 = vmatpush2.msra.mxu0 0.0
    %677 = vmatprep.subr.mxu0 0.0
    %678 = vmatpush2.msra.mxu0 0.0
    %679 = vmatprep.subr.mxu0 0.0
    %680 = vmatpush2.msra.mxu0 0.0
    %681 = vmatprep.subr.mxu0 0.0
    %682 = vmatpush2.msra.mxu0 0.0
    %683 = vmatprep.subr.mxu0 0.0
    %684 = vmatpush2.msra.mxu0 0.0
    %685 = vmatprep.subr.mxu0 0.0
    %686 = vmatpush2.msra.mxu0 0.0
    %687 = vmatprep.subr.mxu0 0.0
    %688 = vmatpush2.msra.mxu0 0.0
    %689 = vmatprep.mubr.f32.mxu0 0.0
    %690 = vmatmul.mubr.f32.gmra.mxu0 %v620
    %v691 = vpop.f32.mrf.mxu0
    %v692 = vadd.f32 %v618, %v691
    %v693 = vpop.f32.mrf.mxu0
    %694 = vmatprep.mubr.f32.mxu0 0.0
    %695 = vmatmul.mubr.f32.gmra.mxu0 %v623
    %v696 = vpop.f32.mrf.mxu0
    %v697 = vadd.f32 %v618, %v696
    %v698 = vpop.f32.mrf.mxu0
    %699 = vdwg.mxu0
    %v701 = vsel %vm149, %v390, 0
    %v704 = vsel %vm149, %v692, 0
    %706 = vmatprep.subr.mxu0 0.0
    %707 = vmatpush1.xpose.msra.mxu0 0.0
    %708 = vmatprep.subr.mxu0 0.0
    %709 = vmatpush1.xpose.msra.mxu0 0.0
    %710 = vmatprep.subr.mxu0 0.0
    %711 = vmatpush1.xpose.msra.mxu0 0.0
    %712 = vmatprep.subr.mxu0 0.0
    %713 = vmatpush1.xpose.msra.mxu0 0.0
    %714 = vmatprep.subr.mxu0 0.0
    %715 = vmatpush1.xpose.msra.mxu0 0.0
    %716 = vmatprep.subr.mxu0 0.0
    %717 = vmatpush1.xpose.msra.mxu0 0.0
    %718 = vmatprep.subr.mxu0 0.0
    %719 = vmatpush1.xpose.msra.mxu0 0.0
    %720 = vmatprep.subr.mxu0 0.0
    %721 = vmatpush1.xpose.msra.mxu0 0.0
    %722 = vmatprep.subr.mxu0 0.0
    %723 = vmatpush1.xpose.msra.mxu0 0.0
    %724 = vmatprep.subr.mxu0 0.0
    %725 = vmatpush1.xpose.msra.mxu0 0.0
    %726 = vmatprep.subr.mxu0 0.0
    %727 = vmatpush1.xpose.msra.mxu0 0.0
    %728 = vmatprep.subr.mxu0 0.0
    %729 = vmatpush1.xpose.msra.mxu0 0.0
    %730 = vmatprep.subr.mxu0 0.0
    %731 = vmatpush1.xpose.msra.mxu0 0.0
    %732 = vmatprep.subr.mxu0 0.0
    %733 = vmatpush1.xpose.msra.mxu0 0.0
    %734 = vmatprep.subr.mxu0 0.0
    %735 = vmatpush1.xpose.msra.mxu0 0.0
    %736 = vmatprep.subr.mxu0 0.0
    %737 = vmatpush1.xpose.msra.mxu0 %v704
    %738 = vmatprep.subr.mxu0 0.0
    %739 = vmatpush2.xpose.msra.mxu0 0.0
    %740 = vmatprep.subr.mxu0 0.0
    %741 = vmatpush2.xpose.msra.mxu0 0.0
    %742 = vmatprep.subr.mxu0 0.0
    %743 = vmatpush2.xpose.msra.mxu0 0.0
    %744 = vmatprep.subr.mxu0 0.0
    %745 = vmatpush2.xpose.msra.mxu0 0.0
    %746 = vmatprep.subr.mxu0 0.0
    %747 = vmatpush2.xpose.msra.mxu0 0.0
    %748 = vmatprep.subr.mxu0 0.0
    %749 = vmatpush2.xpose.msra.mxu0 0.0
    %750 = vmatprep.subr.mxu0 0.0
    %751 = vmatpush2.xpose.msra.mxu0 0.0
    %752 = vmatprep.subr.mxu0 0.0
    %753 = vmatpush2.xpose.msra.mxu0 0.0
    %754 = vmatprep.subr.mxu0 0.0
    %755 = vmatpush2.xpose.msra.mxu0 0.0
    %756 = vmatprep.subr.mxu0 0.0
    %757 = vmatpush2.xpose.msra.mxu0 0.0
    %758 = vmatprep.subr.mxu0 0.0
    %759 = vmatpush2.xpose.msra.mxu0 0.0
    %760 = vmatprep.subr.mxu0 0.0
    %761 = vmatpush2.xpose.msra.mxu0 0.0
    %762 = vmatprep.subr.mxu0 0.0
    %763 = vmatpush2.xpose.msra.mxu0 0.0
    %764 = vmatprep.subr.mxu0 0.0
    %765 = vmatpush2.xpose.msra.mxu0 0.0
    %766 = vmatprep.subr.mxu0 0.0
    %767 = vmatpush2.xpose.msra.mxu0 0.0
    %768 = vmatprep.subr.mxu0 0.0
    %769 = vmatpush2.xpose.msra.mxu0 0.0
    %770 = vmatprep.mubr.f32.mxu0 0.0
    %771 = vmatmul.mubr.f32.gmra.mxu0 %v701
    %v772 = vpop.f32.mrf.mxu0
    %v773 = vadd.f32 0.0, %v772
    %v774 = vpop.f32.mrf.mxu0
    %775 = vdwg.mxu0
    %vm776 = vcmask 57344
    %777 = vst.msk [vmem:[#allocation5] sm:$0x1] %vm776, %v773
    %v778 = vrot.slane %v390, 1
    %v779 = vsel %vm149, %v778, 0
    %v782 = vsel %vm149, %v697, 0
    %784 = vmatprep.subr.mxu0 0.0
    %785 = vmatpush1.xpose.msra.mxu0 0.0
    %786 = vmatprep.subr.mxu0 0.0
    %787 = vmatpush1.xpose.msra.mxu0 0.0
    %788 = vmatprep.subr.mxu0 0.0
    %789 = vmatpush1.xpose.msra.mxu0 0.0
    %790 = vmatprep.subr.mxu0 0.0
    %791 = vmatpush1.xpose.msra.mxu0 0.0
    %792 = vmatprep.subr.mxu0 0.0
    %793 = vmatpush1.xpose.msra.mxu0 0.0
    %794 = vmatprep.subr.mxu0 0.0
    %795 = vmatpush1.xpose.msra.mxu0 0.0
    %796 = vmatprep.subr.mxu0 0.0
    %797 = vmatpush1.xpose.msra.mxu0 0.0
    %798 = vmatprep.subr.mxu0 0.0
    %799 = vmatpush1.xpose.msra.mxu0 0.0
    %800 = vmatprep.subr.mxu0 0.0
    %801 = vmatpush1.xpose.msra.mxu0 0.0
    %802 = vmatprep.subr.mxu0 0.0
    %803 = vmatpush1.xpose.msra.mxu0 0.0
    %804 = vmatprep.subr.mxu0 0.0
    %805 = vmatpush1.xpose.msra.mxu0 0.0
    %806 = vmatprep.subr.mxu0 0.0
    %807 = vmatpush1.xpose.msra.mxu0 0.0
    %808 = vmatprep.subr.mxu0 0.0
    %809 = vmatpush1.xpose.msra.mxu0 0.0
    %810 = vmatprep.subr.mxu0 0.0
    %811 = vmatpush1.xpose.msra.mxu0 0.0
    %812 = vmatprep.subr.mxu0 0.0
    %813 = vmatpush1.xpose.msra.mxu0 0.0
    %814 = vmatprep.subr.mxu0 0.0
    %815 = vmatpush1.xpose.msra.mxu0 %v782
    %816 = vmatprep.subr.mxu0 0.0
    %817 = vmatpush2.xpose.msra.mxu0 0.0
    %818 = vmatprep.subr.mxu0 0.0
    %819 = vmatpush2.xpose.msra.mxu0 0.0
    %820 = vmatprep.subr.mxu0 0.0
    %821 = vmatpush2.xpose.msra.mxu0 0.0
    %822 = vmatprep.subr.mxu0 0.0
    %823 = vmatpush2.xpose.msra.mxu0 0.0
    %824 = vmatprep.subr.mxu0 0.0
    %825 = vmatpush2.xpose.msra.mxu0 0.0
    %826 = vmatprep.subr.mxu0 0.0
    %827 = vmatpush2.xpose.msra.mxu0 0.0
    %828 = vmatprep.subr.mxu0 0.0
    %829 = vmatpush2.xpose.msra.mxu0 0.0
    %830 = vmatprep.subr.mxu0 0.0
    %831 = vmatpush2.xpose.msra.mxu0 0.0
    %832 = vmatprep.subr.mxu0 0.0
    %833 = vmatpush2.xpose.msra.mxu0 0.0
    %834 = vmatprep.subr.mxu0 0.0
    %835 = vmatpush2.xpose.msra.mxu0 0.0
    %836 = vmatprep.subr.mxu0 0.0
    %837 = vmatpush2.xpose.msra.mxu0 0.0
    %838 = vmatprep.subr.mxu0 0.0
    %839 = vmatpush2.xpose.msra.mxu0 0.0
    %840 = vmatprep.subr.mxu0 0.0
    %841 = vmatpush2.xpose.msra.mxu0 0.0
    %842 = vmatprep.subr.mxu0 0.0
    %843 = vmatpush2.xpose.msra.mxu0 0.0
    %844 = vmatprep.subr.mxu0 0.0
    %845 = vmatpush2.xpose.msra.mxu0 0.0
    %846 = vmatprep.subr.mxu0 0.0
    %847 = vmatpush2.xpose.msra.mxu0 0.0
    %848 = vmatprep.mubr.f32.mxu0 0.0
    %849 = vmatmul.mubr.f32.gmra.mxu0 %v779
    %v850 = vpop.f32.mrf.mxu0
    %v851 = vadd.f32 0.0, %v850
    %v852 = vpop.f32.mrf.mxu0
    %853 = vdwg.mxu0
    %854 = vst.msk [vmem:[#allocation5 + $0x1] sm:$0x1] %vm776, %v851
    // Predicated region
    $region34: #{tpu_custom_call.1} parent=1 // pred_check
      _
    $region35: #{tpu_custom_call.1} parent=1 // pred_check_branch
      %856 = sbr.rel (0) target = $region37
    $region36: #{tpu_custom_call.1} parent=1 // pred_region
      %s858 = ssub.s32 32, 32
      %859 = vsyncadd [#allocation4], %s858
      %s861 = sshll.u32 [#allocation5], 4
      %s862 = int_to_ptr.vmem [resolvable:$true] %s861
      %864 = dma.vmem_to_hbm [thread:$0]  %s862, 32, %s7, [#allocation4]
    $region37: #{tpu_custom_call.1} parent=1 // pred_fallthru
      _
    // Predicated region
    $region38: #{tpu_custom_call.1} parent=1 // pred_check
      _
    $region39: #{tpu_custom_call.1} parent=1 // pred_check_branch
      %866 = sbr.rel (0) target = $region41
    $region40: #{tpu_custom_call.1} parent=1 // pred_region
      %867 = dma.done [#allocation4], 32
    $region41: #{tpu_custom_call.1} parent=1 // pred_fallthru
      _
    %868 = vsyncpa [#allocation3], 1
    %869 = vsyncpa [#allocation4], 1

</llo_original>
